<compile_context>
chip_gen: v5e
topology: v5e:2x2
jax: 0.10.0
libtpu: 0.0.40
codegen_flags: <defaults>
</compile_context>

<pallas_src>
import math
import functools

import jax
import jax.numpy as jnp
from jax import lax
from jax.experimental import pallas as pl
from jax.experimental.pallas import tpu as pltpu

_LANE = 128
_SUB = 8
_MIB = 1 << 20


def _round_up(x, m):
    return ((x + m - 1) // m) * m


def _clamp_vmem(block_bytes):
    # Explicit scoped-VMEM limit: 1.5x the estimated per-step footprint,
    # clamped to [32 MiB, 64 MiB] so it is valid on every generation
    # (v7x has 64 MiB physical per TensorCore).
    return int(min(max(int(block_bytes * 1.5), 32 * _MIB), 64 * _MIB))


# -----------------------------------------------------------------------------
# Linear projection kernel: y = x @ w + b, rows tiled over a 1-D grid.
# -----------------------------------------------------------------------------
def _linear_kernel(x_ref, w_ref, b_ref, o_ref):
    acc = jnp.dot(x_ref[...], w_ref[...], preferred_element_type=jnp.float32)
    o_ref[...] = (acc + b_ref[...]).astype(o_ref.dtype)


def _pallas_linear(x2d, w, b, *, out_dtype, row_tile=256):
    """y = x2d @ w + b. x2d: (R, Din), w: (Din, Dout), b: (Dout,).

    Din / Dout must already be padded to multiples of 128 by the caller.
    """
    R, Din = x2d.shape
    Dout = w.shape[1]
    xb = x2d.dtype.itemsize
    ob = jnp.dtype(out_dtype).itemsize

    tr = min(row_tile, _round_up(R, _SUB))
    Rp = _round_up(R, tr)
    xp = x2d if Rp == R else jnp.pad(x2d, ((0, Rp - R), (0, 0)))
    b2 = b.reshape(1, Dout)

    block_bytes = (2 * tr * Din * xb                 # x tile (double-buffered)
                   + Din * Dout * w.dtype.itemsize   # weights (single buffer)
                   + Dout * b2.dtype.itemsize        # bias (single buffer)
                   + 2 * tr * Dout * ob              # out tile (double-buffered)
                   + tr * Dout * 4)                  # f32 accumulator temp

    out = pl.pallas_call(
        _linear_kernel,
        out_shape=jax.ShapeDtypeStruct((Rp, Dout), out_dtype),
        grid_spec=pltpu.PrefetchScalarGridSpec(
            num_scalar_prefetch=0,
            grid=(Rp // tr,),
            in_specs=[
                pl.BlockSpec((tr, Din), lambda r: (r, 0)),
                # Weights / bias are identical for every grid step: a single
                # buffer (no double-buffering) is enough and saves VMEM.
                pl.BlockSpec((Din, Dout), lambda r: (0, 0),
                             pipeline_mode=pl.Buffered(1)),
                pl.BlockSpec((1, Dout), lambda r: (0, 0),
                             pipeline_mode=pl.Buffered(1)),
            ],
            out_specs=pl.BlockSpec((tr, Dout), lambda r: (r, 0)),
        ),
        compiler_params=pltpu.CompilerParams(
            dimension_semantics=("parallel",),
            vmem_limit_bytes=_clamp_vmem(block_bytes)),
        cost_estimate=pl.CostEstimate(
            flops=int(2 * Rp * Din * Dout),
            transcendentals=0,
            bytes_accessed=int(Rp * Din * xb + Din * Dout * w.dtype.itemsize
                               + Dout * b2.dtype.itemsize + Rp * Dout * ob)),
    )(xp, w, b2)

    return out if Rp == R else out[:R]


# -----------------------------------------------------------------------------
# Attention kernel: one (batch element, query tile) per grid step.
# -----------------------------------------------------------------------------
def _attention_kernel(m_real, q_ref, k_ref, v_ref, o_ref, att_ref):
    """q_ref: (tn, Dvp) pre-scaled projected queries
       k_ref: (Mp, Dvp) projected keys
       v_ref: (Mp, Dvp) projected values
       o_ref: (tn, Dvp) output, att_ref: (tn, Mp) attention probabilities."""
    mp = k_ref.shape[0]

    # Scores: contract last dims (no materialized transpose through the XLU).
    scores = lax.dot_general(
        q_ref[...], k_ref[...],
        dimension_numbers=(((1,), (1,)), ((), ())),
        preferred_element_type=jnp.float32)                      # (tn, Mp) f32

    # Mask padded key columns with a lane-only iota broadcast over rows.
    if m_real != mp:
        col = lax.broadcasted_iota(jnp.int32, (1, mp), 1)
        scores = jnp.where(col < m_real, scores, jnp.float32(-1e30))

    # Numerically stable softmax over the key axis.  The reciprocal is exact
    # (tn elements, negligible cost) so returned rows sum to 1 at f32 accuracy.
    scores = scores - jnp.max(scores, axis=-1, keepdims=True)
    expd = jnp.exp(scores)
    inv = 1.0 / jnp.sum(expd, axis=-1, keepdims=True)
    atten = expd * inv

    # Cast once to the compute dtype and reuse for the store and the matmul.
    cdt = v_ref.dtype
    atten_c = atten.astype(cdt)
    att_ref[...] = atten_c if att_ref.dtype == cdt else atten.astype(att_ref.dtype)

    o_ref[...] = jnp.dot(atten_c, v_ref[...],
                         preferred_element_type=jnp.float32).astype(o_ref.dtype)


def muti_attention_layer(query, key, value, params, *, dim_k,
                         tile_n=256, atten_dtype=None):
    """Pallas implementation of MutiAttentionLayer.forward.

    query: (B, N, dim_q), key: (B, M, dim_k), value: (B, M, dim_v)
    params: wq (dim_q, dim_v), bq (dim_v,), wk (dim_k, dim_v), bk (dim_v,),
            wv (dim_v, dim_v), bv (dim_v,)   [weights stored as (in, out)]
    Returns (o_mat (B, N, dim_v), atten (B, N, M)).
    atten_dtype: optionally store the attention matrix in a narrower dtype
                 (e.g. bf16 on v5e) to halve the dominant HBM writeback.
    """
    B, N, dim_q = query.shape
    _, M, dim_k_in = key.shape
    _, _, dim_v = value.shape

    io_dtype = query.dtype
    att_dtype = jnp.dtype(io_dtype) if atten_dtype is None else jnp.dtype(atten_dtype)
    norm_fact = 1.0 / math.sqrt(dim_k)

    Dqp = _round_up(dim_q, _LANE)
    Dkp = _round_up(dim_k_in, _LANE)
    Dvp = _round_up(dim_v, _LANE)
    Mp = _round_up(M, _LANE)

    bio = jnp.dtype(io_dtype).itemsize
    bat = att_dtype.itemsize

    # Query-tile size: largest that keeps the per-step footprint within a
    # ~24 MiB budget (re-derived so it also fits v7x's 64 MiB VMEM).
    def _block_bytes(t):
        return (2 * t * Dvp * bio            # q tile (double-buffered)
                + 2 * 2 * Mp * Dvp * bio     # k + v (double-buffered)
                + 2 * t * Dvp * bio          # o tile (double-buffered)
                + 2 * t * Mp * bat           # atten tile (double-buffered)
                + 3 * t * Mp * 4)            # f32 scores / exp / atten temps

    tn = min(tile_n, _round_up(N, _SUB))
    while tn > 128 and _block_bytes(tn) > 24 * _MIB:
        tn //= 2
    Np = _round_up(N, tn)
    # TODO(synk): for very large M the full (Mp, Dvp) K/V rows no longer fit
    # the budget; that would need flash-style key tiling, but the module's API
    # materializes the full (N, M) attention matrix anyway.

    # Zero-pad inputs to lane/sublane-friendly shapes.
    qp = jnp.pad(query, ((0, 0), (0, Np - N), (0, Dqp - dim_q)))
    kp = jnp.pad(key, ((0, 0), (0, Mp - M), (0, Dkp - dim_k_in)))
    vp = jnp.pad(value, ((0, 0), (0, Mp - M), (0, Dvp - dim_v)))

    # Fold the attention scale into the Q projection; pad all parameters.
    f32 = jnp.float32
    wq = jnp.pad(params["wq"].astype(f32) * norm_fact,
                 ((0, Dqp - dim_q), (0, Dvp - dim_v))).astype(io_dtype)
    bq = jnp.pad(params["bq"].astype(f32) * norm_fact,
                 ((0, Dvp - dim_v),)).astype(io_dtype)
    wk = jnp.pad(params["wk"], ((0, Dkp - dim_k_in), (0, Dvp - dim_v))).astype(io_dtype)
    bk = jnp.pad(params["bk"], ((0, Dvp - dim_v),)).astype(io_dtype)
    wv = jnp.pad(params["wv"], ((0, Dvp - dim_v), (0, Dvp - dim_v))).astype(io_dtype)
    bv = jnp.pad(params["bv"], ((0, Dvp - dim_v),)).astype(io_dtype)

    # Projections, hoisted out of the attention kernel (separate pallas_calls,
    # batch flattened into rows so the MXU sees B*rows per step).
    q_proj = _pallas_linear(qp.reshape(B * Np, Dqp), wq, bq,
                            out_dtype=io_dtype).reshape(B, Np, Dvp)
    k_proj = _pallas_linear(kp.reshape(B * Mp, Dkp), wk, bk,
                            out_dtype=io_dtype).reshape(B, Mp, Dvp)
    v_proj = _pallas_linear(vp.reshape(B * Mp, Dvp), wv, bv,
                            out_dtype=io_dtype).reshape(B, Mp, Dvp)

    kernel = functools.partial(_attention_kernel, M)

    flops = 4 * B * Np * Mp * Dvp                       # QK^T + atten @ V
    transcendentals = B * Np * Mp                       # exp
    bytes_accessed = ((B * Np * Dvp + 2 * B * Mp * Dvp) * bio   # q, k, v in
                      + B * Np * Dvp * bio                      # o out
                      + B * Np * Mp * bat)                      # atten out

    o_p, a_p = pl.pallas_call(
        kernel,
        out_shape=(jax.ShapeDtypeStruct((B, Np, Dvp), io_dtype),
                   jax.ShapeDtypeStruct((B, Np, Mp), att_dtype)),
        grid_spec=pltpu.PrefetchScalarGridSpec(
            num_scalar_prefetch=0,
            grid=(B, Np // tn),
            in_specs=[
                pl.BlockSpec((None, tn, Dvp), lambda b, n: (b, n, 0)),   # q tile
                pl.BlockSpec((None, Mp, Dvp), lambda b, n: (b, 0, 0)),   # k (per b)
                pl.BlockSpec((None, Mp, Dvp), lambda b, n: (b, 0, 0)),   # v (per b)
            ],
            out_specs=(
                pl.BlockSpec((None, tn, Dvp), lambda b, n: (b, n, 0)),
                pl.BlockSpec((None, tn, Mp), lambda b, n: (b, n, 0)),
            ),
        ),
        compiler_params=pltpu.CompilerParams(
            # No cross-step carry -> both axes can shard across v7x's two TCs.
            dimension_semantics=("parallel", "parallel"),
            vmem_limit_bytes=_clamp_vmem(_block_bytes(tn))),
        cost_estimate=pl.CostEstimate(flops=int(flops),
                                      transcendentals=int(transcendentals),
                                      bytes_accessed=int(bytes_accessed)),
    )(q_proj, k_proj, v_proj)

    return o_p[:, :N, :dim_v], a_p[:, :N, :M]


# -----------------------------------------------------------------------------
# Reference + deterministic init + self-test.
# -----------------------------------------------------------------------------
def init_params(key, dim_q, dim_k, dim_v):
    """Deterministic init mimicking nn.Linear (weights stored as (in, out))."""
    ks = jax.random.split(key, 6)

    def lin(kw, kb, fan_in, fan_out):
        bound = 1.0 / math.sqrt(fan_in)
        w = jax.random.uniform(kw, (fan_in, fan_out), jnp.float32, -bound, bound)
        b = jax.random.uniform(kb, (fan_out,), jnp.float32, -bound, bound)
        return w, b

    wq, bq = lin(ks[0], ks[1], dim_q, dim_v)
    wk, bk = lin(ks[2], ks[3], dim_k, dim_v)
    wv, bv = lin(ks[4], ks[5], dim_v, dim_v)
    return dict(wq=wq, bq=bq, wk=wk, bk=bk, wv=wv, bv=bv)


def reference_forward(query, key, value, params, dim_k):
    q_mat = query @ params["wq"] + params["bq"]
    k_mat = key @ params["wk"] + params["bk"]
    v_mat = value @ params["wv"] + params["bv"]
    atten = jnp.einsum("bnd,bmd->bnm", q_mat, k_mat) / math.sqrt(dim_k)
    atten = jax.nn.softmax(atten, axis=-1)
    o_mat = jnp.einsum("bnm,bmd->bnd", atten, v_mat)
    return o_mat, atten


if __name__ == "__main__":
    # Small shapes: batch=2, seq=8, dim_q=dim_k=dim_v=32 (self-attention path:
    # key=value=query, matching the module's default when key/value are None).
    B, N = 2, 8
    dim_q = dim_k = dim_v = 32

    root = jax.random.PRNGKey(0)
    k_inp, k_par = jax.random.split(root)

    query = jax.random.normal(k_inp, (B, N, dim_q), jnp.float32)
    key = query      # forward(query) with key=None, value=None
    value = query

    params = init_params(k_par, dim_q, dim_k, dim_v)

    o_mat, atten = muti_attention_layer(query, key, value, params, dim_k=dim_k)
    o_mat = jax.block_until_ready(o_mat)
    atten = jax.block_until_ready(atten)

    o_ref, a_ref = reference_forward(query, key, value, params, dim_k)
    assert o_mat.shape == (B, N, dim_v) and atten.shape == (B, N, N)
    assert jnp.allclose(o_mat, o_ref, atol=1e-3, rtol=1e-3)
    assert jnp.allclose(atten, a_ref, atol=1e-3, rtol=1e-3)

    print("KERNEL_OK")
</pallas_src>

<mosaic_0001>
module attributes {stable_mosaic.version = 11 : i64} {
  func.func @_linear_kernel(%arg0: i32, %arg1: memref<16x128xf32, #tpu.memory_space<vmem>>, %arg2: memref<128x128xf32, #tpu.memory_space<vmem>>, %arg3: memref<1x128xf32, #tpu.memory_space<vmem>>, %arg4: memref<16x128xf32, #tpu.memory_space<vmem>>) attributes {dimension_semantics = [#tpu.dimension_semantics<parallel>], iteration_bounds = array<i64: 1>, scalar_prefetch = 0 : i64, scratch_operands = 0 : i64, tpu.core_type = #tpu.core_type<tc>, window_params = [{transform_indices = @transform_0, window_bounds = array<i64: 16, 128>}, {pipeline_mode = #tpu.pipeline_mode<synchronous>, transform_indices = @transform_1, window_bounds = array<i64: 128, 128>}, {pipeline_mode = #tpu.pipeline_mode<synchronous>, transform_indices = @transform_2, window_bounds = array<i64: 1, 128>}, {transform_indices = @transform_3, window_bounds = array<i64: 16, 128>}]} {
    %c0 = arith.constant 0 : index
    %c0_0 = arith.constant 0 : index
    %0 = vector.load %arg1[%c0, %c0_0] : memref<16x128xf32, #tpu.memory_space<vmem>>, vector<16x128xf32>
    %c0_1 = arith.constant 0 : index
    %c0_2 = arith.constant 0 : index
    %1 = vector.load %arg2[%c0_1, %c0_2] : memref<128x128xf32, #tpu.memory_space<vmem>>, vector<128x128xf32>
    %cst = arith.constant dense<0.000000e+00> : vector<16x128xf32>
    %2 = tpu.matmul %0, %1, %cst {dimension_numbers = #tpu.dot_dimension_numbers<[1], [0], [0], [1], [0, 0, 1, 1], [], []>} : vector<16x128xf32>, vector<128x128xf32>, vector<16x128xf32> -> vector<16x128xf32>
    %c0_3 = arith.constant 0 : index
    %c0_4 = arith.constant 0 : index
    %3 = vector.load %arg3[%c0_3, %c0_4] : memref<1x128xf32, #tpu.memory_space<vmem>>, vector<1x128xf32>
    %4 = vector.broadcast %3 : vector<1x128xf32> to vector<16x128xf32>
    %5 = arith.addf %2, %4 : vector<16x128xf32>
    %c0_5 = arith.constant 0 : index
    %c0_6 = arith.constant 0 : index
    %6 = vector.load %arg4[%c0_5, %c0_6] : memref<16x128xf32, #tpu.memory_space<vmem>>, vector<16x128xf32>
    tpu.vector_store %arg4[%c0_5, %c0_6], %5 {strides = array<i32>} : memref<16x128xf32, #tpu.memory_space<vmem>>, vector<16x128xf32>,
    return
  }
  func.func @transform_0(%arg0: i32) -> (i32, i32) {
    %c0_i32 = arith.constant 0 : i32
    %c0_i32_0 = arith.constant 0 : i32
    return %arg0, %c0_i32 : i32, i32
  }
  func.func @transform_1(%arg0: i32) -> (i32, i32) {
    %c0_i32 = arith.constant 0 : i32
    %c0_i32_0 = arith.constant 0 : i32
    %c0_i32_1 = arith.constant 0 : i32
    return %c0_i32, %c0_i32_0 : i32, i32
  }
  func.func @transform_2(%arg0: i32) -> (i32, i32) {
    %c0_i32 = arith.constant 0 : i32
    %c0_i32_0 = arith.constant 0 : i32
    %c0_i32_1 = arith.constant 0 : i32
    return %c0_i32, %c0_i32_0 : i32, i32
  }
  func.func @transform_3(%arg0: i32) -> (i32, i32) {
    %c0_i32 = arith.constant 0 : i32
    %c0_i32_0 = arith.constant 0 : i32
    return %arg0, %c0_i32 : i32, i32
  }
}

</mosaic_0001>

<llo_original>
// kernel: tpu_custom_call.1
$region0: #{tpu_custom_call.1}
  #allocation0 [shape = 'u32[]', space=smem, size = 0x4, offset = 0x4, fixed_abs, tag = 'smem constant byte address 0x4 - core index']
  #allocation1 [shape = 'u32[72,128]{1,0:T(1,128)}', space=vmem, size = 0x9000, scoped, tag = 'internal scratch']
  %s0 = inlined_call_operand.hbm [shape: f32[16,128], index: 0, kind: input, shape index: {}]
  %s1 = inlined_call_operand.hbm [shape: f32[128,128], index: 1, kind: input, shape index: {}]
  %s2 = inlined_call_operand.vmem [shape: f32[1,128], index: 2, kind: input, shape index: {}]
  %s3 = inlined_call_operand.hbm [shape: f32[16,128], index: 3, kind: output, shape index: {}]
  %s4 = sld [smem:[#allocation0]]
  $region30: #{tpu_custom_call.1} parent=0
    _
  %s6 = ssub.s32 1, %s4
  %s7 = scalar_select 0, %s6, %s4
  $region1: #{tpu_custom_call.1} parent=0
    #allocation2 [shape = 'u8[8192]{0}', space=vmem, size = 0x2000, scoped, tag = 'input window, operand 0, single buffered']
    #allocation3 [shape = 's32[1]{0}', space=sflag, size = 0x4, scoped, tag = 'scoped memory for tpu_custom_call.1']
    #allocation4 [shape = 's32[1]{0}', space=sflag, size = 0x4, scoped, tag = 'scoped memory for tpu_custom_call.1']
    #allocation5 [shape = 'u8[65536]{0}', space=vmem, size = 0x10000, scoped, tag = 'input window, operand 1, single buffered']
    #allocation6 [shape = 's32[1]{0}', space=sflag, size = 0x4, scoped, tag = 'scoped memory for tpu_custom_call.1']
    #allocation7 [shape = 'u8[8192]{0}', space=vmem, size = 0x2000, scoped, tag = 'output window, operand 0, single buffered']
    %8 = vsyncpa [#allocation3], 0
    %9 = vsyncpa [#allocation6], 0
    %10 = vsyncpa [#allocation4], 0
    // Predicated region
    $region2: #{tpu_custom_call.1} parent=1 // pred_check
      _
    $region3: #{tpu_custom_call.1} parent=1 // pred_check_branch
      %12 = sbr.rel (0) target = $region5
    $region4: #{tpu_custom_call.1} parent=1 // pred_region
      %14 = vsyncadd [#allocation3], 0
      %s15 = sshll.u32 %s0, 4
      %s16 = int_to_ptr.hbm [resolvable:$true] %s15
      %s17 = sshll.u32 [#allocation2], 4
      %s18 = int_to_ptr.vmem [resolvable:$true] %s17
      %23 = dma.hbm_to_vmem [thread:$0]  %s16, 256, %s18, [#allocation3], 128, 128, 8
    $region5: #{tpu_custom_call.1} parent=1 // pred_fallthru
      _
    // Predicated region
    $region6: #{tpu_custom_call.1} parent=1 // pred_check
      _
    $region7: #{tpu_custom_call.1} parent=1 // pred_check_branch
      %25 = sbr.rel (0) target = $region9
    $region8: #{tpu_custom_call.1} parent=1 // pred_region
      %27 = vsyncadd [#allocation6], 0
      %s28 = sshll.u32 %s1, 4
      %s29 = int_to_ptr.hbm [resolvable:$true] %s28
      %s30 = sshll.u32 [#allocation5], 4
      %s31 = int_to_ptr.vmem [resolvable:$true] %s30
      %36 = dma.hbm_to_vmem [thread:$0]  %s29, 2048, %s31, [#allocation6], 128, 128, 8
    $region9: #{tpu_custom_call.1} parent=1 // pred_fallthru
      _
    // Predicated region
    $region10: #{tpu_custom_call.1} parent=1 // pred_check
      _
    $region11: #{tpu_custom_call.1} parent=1 // pred_check_branch
      %38 = sbr.rel (0) target = $region13
    $region12: #{tpu_custom_call.1} parent=1 // pred_region
      _
    $region13: #{tpu_custom_call.1} parent=1 // pred_fallthru
      _
    // Predicated region
    $region14: #{tpu_custom_call.1} parent=1 // pred_check
      _
    $region15: #{tpu_custom_call.1} parent=1 // pred_check_branch
      %40 = sbr.rel (0) target = $region17
    $region16: #{tpu_custom_call.1} parent=1 // pred_region
      %42 = dma.done [#allocation3], 256
    $region17: #{tpu_custom_call.1} parent=1 // pred_fallthru
      _
    // Predicated region
    $region18: #{tpu_custom_call.1} parent=1 // pred_check
      _
    $region19: #{tpu_custom_call.1} parent=1 // pred_check_branch
      %44 = sbr.rel (0) target = $region21
    $region20: #{tpu_custom_call.1} parent=1 // pred_region
      %46 = dma.done [#allocation6], 2048
    $region21: #{tpu_custom_call.1} parent=1 // pred_fallthru
      _
    %v47 = vld [vmem:[#allocation2] sm:$0xff]
    %v48 = vld [vmem:[#allocation2 + $0x8] sm:$0xff]
    %v49 = vld [vmem:[#allocation5] sm:$0xff]
    %v50 = vld [vmem:[#allocation5 + $0x8] sm:$0xff]
    %v51 = vld [vmem:[#allocation5 + $0x10] sm:$0xff]
    %v52 = vld [vmem:[#allocation5 + $0x18] sm:$0xff]
    %v53 = vld [vmem:[#allocation5 + $0x20] sm:$0xff]
    %v54 = vld [vmem:[#allocation5 + $0x28] sm:$0xff]
    %v55 = vld [vmem:[#allocation5 + $0x30] sm:$0xff]
    %v56 = vld [vmem:[#allocation5 + $0x38] sm:$0xff]
    %v57 = vld [vmem:[#allocation5 + $0x40] sm:$0xff]
    %v58 = vld [vmem:[#allocation5 + $0x48] sm:$0xff]
    %v59 = vld [vmem:[#allocation5 + $0x50] sm:$0xff]
    %v60 = vld [vmem:[#allocation5 + $0x58] sm:$0xff]
    %v61 = vld [vmem:[#allocation5 + $0x60] sm:$0xff]
    %v62 = vld [vmem:[#allocation5 + $0x68] sm:$0xff]
    %v63 = vld [vmem:[#allocation5 + $0x70] sm:$0xff]
    %v64 = vld [vmem:[#allocation5 + $0x78] sm:$0xff]
    %v65 = vld [vmem:[%s2] sm:$0x1]
    %v67 = vperm.slane %v65, 0
    %69 = vmatpush.msra.mxu0 %v64
    %70 = vmatpush.msra.mxu0 %v63
    %71 = vmatpush.msra.mxu0 %v62
    %72 = vmatpush.msra.mxu0 %v61
    %73 = vmatpush.msra.mxu0 %v60
    %74 = vmatpush.msra.mxu0 %v59
    %75 = vmatpush.msra.mxu0 %v58
    %76 = vmatpush.msra.mxu0 %v57
    %77 = vmatpush.msra.mxu0 %v56
    %78 = vmatpush.msra.mxu0 %v55
    %79 = vmatpush.msra.mxu0 %v54
    %80 = vmatpush.msra.mxu0 %v53
    %81 = vmatpush.msra.mxu0 %v52
    %82 = vmatpush.msra.mxu0 %v51
    %83 = vmatpush.msra.mxu0 %v50
    %84 = vmatpush.msra.mxu0 %v49
    %85 = vmatmul.f32.gmra.mxu0 %v47
    %v86 = vpop.f32.mrf.mxu0
    %v87 = vadd.f32 %v67, %v86
    %88 = vmatmul.f32.gmra.mxu0 %v48
    %v89 = vpop.f32.mrf.mxu0
    %v90 = vadd.f32 %v67, %v89
    %91 = vdwg.mxu0
    %92 = vst [vmem:[#allocation7] sm:$0xff] %v87
    %93 = vst [vmem:[#allocation7 + $0x8] sm:$0xff] %v90
    // Predicated region
    $region22: #{tpu_custom_call.1} parent=1 // pred_check
      _
    $region23: #{tpu_custom_call.1} parent=1 // pred_check_branch
      %95 = sbr.rel (0) target = $region25
    $region24: #{tpu_custom_call.1} parent=1 // pred_region
      %97 = vsyncadd [#allocation4], 0
      %s98 = sshll.u32 [#allocation7], 4
      %s99 = int_to_ptr.vmem [resolvable:$true] %s98
      %s100 = sshll.u32 %s3, 4
      %s101 = int_to_ptr.hbm [resolvable:$true] %s100
      %106 = dma.vmem_to_hbm [thread:$0]  %s99, 256, %s101, [#allocation4], 128, 128, 8
    $region25: #{tpu_custom_call.1} parent=1 // pred_fallthru
      _
    // Predicated region
    $region26: #{tpu_custom_call.1} parent=1 // pred_check
      _
    $region27: #{tpu_custom_call.1} parent=1 // pred_check_branch
      %108 = sbr.rel (0) target = $region29
    $region28: #{tpu_custom_call.1} parent=1 // pred_region
      %110 = dma.done [#allocation4], 256
    $region29: #{tpu_custom_call.1} parent=1 // pred_fallthru
      _
    %111 = vsyncpa [#allocation3], 1
    %112 = vsyncpa [#allocation6], 1
    %113 = vsyncpa [#allocation4], 1

</llo_original>
